<compile_context>
chip_gen: v7x
topology: tpu7x:2x2x1
jax: 0.10.0
libtpu: 0.0.40
codegen_flags: <defaults>
</compile_context>

<pallas_src>
import functools
import math

import jax
import jax.numpy as jnp
from jax.experimental import pallas as pl
from jax.experimental.pallas import tpu as pltpu


# --------------------------------------------------------------------------- #
# Per-generation defaults                                                       #
# --------------------------------------------------------------------------- #
@functools.lru_cache(maxsize=None)
def _vmem_capacity_bytes():
    try:
        return int(pltpu.get_tpu_info().vmem_capacity_bytes)
    except Exception:
        return 64 * 1024 * 1024  # conservative (v7x per-core VMEM)


def _default_vmem_limit_bytes():
    # ~3/4 of physical VMEM: 96 MiB on v5e/v6e (128 MiB), 48 MiB on v7x (64 MiB).
    return min((_vmem_capacity_bytes() * 3) // 4, 100 * 1024 * 1024)


def _default_row_block():
    # Bigger row tiles on the 128 MiB-VMEM generations (v5e/v6e), smaller on v7x.
    return 1024 if _vmem_capacity_bytes() >= 96 * 1024 * 1024 else 512


_COL_BLOCK = 512  # multiple of 256 (v6e/v7x MXU) and of 128 (v5e MXU)


# --------------------------------------------------------------------------- #
# Kernel 1: row/column-tiled linear projection  y = x @ W + b                  #
# --------------------------------------------------------------------------- #
def _linear_kernel(x_ref, w_ref, b_ref, o_ref):
    # Native-dtype MXU matmul, f32 accumulation (no input upcast).
    acc = jnp.dot(x_ref[...], w_ref[...], preferred_element_type=jnp.float32)
    o_ref[...] = (acc + b_ref[...].astype(jnp.float32)).astype(o_ref.dtype)


def _linear(x2, w, b2, *, row_block, col_block, vmem_limit_bytes):
    """x2: (rows, H_in), w: (H_in, H_out), b2: (1, H_out) -> (rows, H_out)."""
    rows, h_in = x2.shape
    h_out = w.shape[1]

    tm = rows if rows <= row_block else row_block          # full dim or multiple of 8
    tn = h_out if h_out <= col_block else col_block        # full dim or multiple of 128

    return pl.pallas_call(
        _linear_kernel,
        out_shape=jax.ShapeDtypeStruct((rows, h_out), x2.dtype),
        grid_spec=pltpu.PrefetchScalarGridSpec(
            num_scalar_prefetch=0,
            grid=(pl.cdiv(rows, tm), pl.cdiv(h_out, tn)),
            in_specs=[
                pl.BlockSpec((tm, h_in), lambda i, j: (i, 0)),   # x row tile (reused over j)
                pl.BlockSpec((h_in, tn), lambda i, j: (0, j)),   # weight column tile
                pl.BlockSpec((1, tn), lambda i, j: (0, j)),      # bias column tile
            ],
            out_specs=pl.BlockSpec((tm, tn), lambda i, j: (i, j)),
        ),
        compiler_params=pltpu.CompilerParams(
            dimension_semantics=("parallel", "parallel"),
            vmem_limit_bytes=vmem_limit_bytes,
        ),
    )(x2, w, b2)


# --------------------------------------------------------------------------- #
# Kernel 2: (batch, head-group) scaled-dot-product attention                   #
# --------------------------------------------------------------------------- #
def _pick_head_group(nh, sq, sk, d, itembytes):
    """Heads per grid step: amortize grid overhead / enlarge DMAs while keeping the
    in-kernel f32 score temporaries within a modest VMEM budget."""
    per_head = 3 * sq * sk * 4 + (sq + 2 * sk) * d * itembytes
    g = int(max(1, (12 * 1024 * 1024) // max(per_head, 1)))
    g = min(g, nh, 16)
    if g >= nh or nh <= 8:
        return nh
    # A strict sub-group of the head axis must be a multiple of 8 (sublane tiling).
    return max(8, (g // 8) * 8)


def _attention_kernel(*refs, has_mask, out_probs):
    idx = 0
    mask_ref = None
    if has_mask:
        mask_ref = refs[idx]
        idx += 1
    q_ref, k_ref, v_ref, o_ref = refs[idx], refs[idx + 1], refs[idx + 2], refs[idx + 3]
    probs_ref = refs[idx + 4] if out_probs else None

    n_heads = q_ref.shape[1]                                   # heads in this grid step
    mask = mask_ref[...].astype(jnp.float32) if has_mask else None   # (mh, mq, Sk)

    # Static unroll over the head group: every matmul is a plain 2-D MXU dot in the
    # tensors' native dtype, accumulated in f32.
    for h in range(n_heads):
        qh = q_ref[:, h, :]                                    # (Sq, d)
        kh = k_ref[:, h, :]                                    # (Sk, d)
        vh = v_ref[:, h, :]                                    # (Sk, d)

        # scores = q @ k^T ; 1/sqrt(d) is already folded into the Q projection.
        s = jax.lax.dot_general(qh, kh, (((1,), (1,)), ((), ())),
                                preferred_element_type=jnp.float32)   # (Sq, Sk)
        if has_mask:
            s = s + (mask[0] if mask.shape[0] == 1 else mask[h])

        m = jnp.max(s, axis=-1, keepdims=True)
        e = jnp.exp(s - m)
        denom = jnp.sum(e, axis=-1, keepdims=True)
        inv = pl.reciprocal(denom)   # one reciprocal per row (approx=True would use EUP)

        if out_probs:
            p = e * inv
            probs_ref[h] = p.astype(probs_ref.dtype)
            ctx = jnp.dot(p.astype(vh.dtype), vh, preferred_element_type=jnp.float32)
        else:
            # Defer normalization past P@V: Sq*d multiplies instead of Sq*Sk divides.
            ctx = jnp.dot(e.astype(vh.dtype), vh, preferred_element_type=jnp.float32) * inv

        o_ref[:, pl.ds(h, 1), :] = ctx[:, None, :].astype(o_ref.dtype)


def _multihead_attention(q_arr, k_arr, v_arr, t_q, t_k, t_v, mask4, *, batch,
                         num_heads, head_dim, sq, sk, output_attentions,
                         vmem_limit_bytes):
    """q_arr: (B, Sq, Tq, nh, d); k_arr/v_arr: (B, Sk, Tk, nh, d) (may alias q_arr)."""
    g = _pick_head_group(num_heads, sq, sk, head_dim, q_arr.dtype.itemsize)
    n_hblk = pl.cdiv(num_heads, g)

    has_mask = mask4 is not None
    kernel = functools.partial(_attention_kernel, has_mask=has_mask,
                               out_probs=output_attentions)

    inputs, in_specs = [], []
    if has_mask:
        _, mh, mq, _ = mask4.shape
        mh_blk = g if mh != 1 else 1
        inputs.append(mask4)
        in_specs.append(pl.BlockSpec(
            (None, mh_blk, mq, sk),
            lambda b_i, g_i, _ph=(mh != 1): (b_i, g_i if _ph else 0, 0, 0)))

    for arr, s_len, t in ((q_arr, sq, t_q), (k_arr, sk, t_k), (v_arr, sk, t_v)):
        inputs.append(arr)
        in_specs.append(pl.BlockSpec(
            (None, s_len, None, g, head_dim),
            lambda b_i, g_i, _t=t: (b_i, 0, _t, g_i, 0)))

    out_shapes = [jax.ShapeDtypeStruct((batch, sq, num_heads, head_dim), q_arr.dtype)]
    out_specs = [pl.BlockSpec((None, sq, g, head_dim), lambda b_i, g_i: (b_i, 0, g_i, 0))]
    if output_attentions:
        out_shapes.append(jax.ShapeDtypeStruct((batch, num_heads, sq, sk), q_arr.dtype))
        out_specs.append(pl.BlockSpec((None, g, sq, sk), lambda b_i, g_i: (b_i, g_i, 0, 0)))

    single = not output_attentions
    result = pl.pallas_call(
        kernel,
        out_shape=out_shapes[0] if single else tuple(out_shapes),
        grid_spec=pltpu.PrefetchScalarGridSpec(
            num_scalar_prefetch=0,
            grid=(batch, n_hblk),
            in_specs=in_specs,
            out_specs=out_specs[0] if single else out_specs,
        ),
        compiler_params=pltpu.CompilerParams(
            dimension_semantics=("parallel", "parallel"),
            vmem_limit_bytes=vmem_limit_bytes,
        ),
    )(*inputs)

    if single:
        return result, None
    ctx, probs = result
    return ctx, probs


# --------------------------------------------------------------------------- #
# Mask normalization: keep head / query dims compact (no nh*Sq broadcast)       #
# --------------------------------------------------------------------------- #
def _prep_mask(attention_mask, batch, num_heads, sq, sk):
    m = jnp.asarray(attention_mask, dtype=jnp.float32)
    if m.ndim > 4:
        raise ValueError("attention_mask must have at most 4 dims")
    m = m.reshape((1,) * (4 - m.ndim) + m.shape)
    if m.shape[1] not in (1, num_heads) or m.shape[2] not in (1, sq):
        m = jnp.broadcast_to(m, (batch, num_heads, sq, sk))      # rare fallback
    else:
        m = jnp.broadcast_to(m, (batch, m.shape[1], m.shape[2], sk))
    return m


# --------------------------------------------------------------------------- #
# Module-level factory (pre-fuses parameters once) + forward                    #
# --------------------------------------------------------------------------- #
def make_bert_self_attention(wq, bq, wk, bk, wv, bv, *, num_heads,
                             row_block=None, col_block=None, vmem_limit_bytes=None):
    """wq/wk/wv are torch nn.Linear weights (out_features, in_features); bq/bk/bv biases.

    Returns a forward(hidden_states, ...) callable matching BertSelfAttention.forward.
    """
    wq, wk, wv = jnp.asarray(wq), jnp.asarray(wk), jnp.asarray(wv)
    bq, bk, bv = jnp.asarray(bq), jnp.asarray(bk), jnp.asarray(bv)

    all_head = wq.shape[0]
    hidden_in = wq.shape[1]
    assert all_head % num_heads == 0, "hidden size must divide num_attention_heads"
    d = all_head // num_heads
    scale = 1.0 / math.sqrt(d)

    row_block = _default_row_block() if row_block is None else row_block
    col_block = _COL_BLOCK if col_block is None else col_block
    vmem_limit_bytes = (_default_vmem_limit_bytes()
                        if vmem_limit_bytes is None else vmem_limit_bytes)

    # Fused [Wq*scale | Wk | Wv] / [bq*scale | bk | bv] built ONCE (not per call).
    w_qkv = jnp.concatenate(
        [(wq.T * scale).astype(wq.dtype), wk.T, wv.T], axis=1)       # (H_in, 3*all_head)
    b_qkv = jnp.concatenate(
        [(bq * scale).astype(bq.dtype), bk, bv]).reshape(1, 3 * all_head)

    def forward(hidden_states, attention_mask=None, head_mask=None,
                encoder_hidden_states=None, encoder_attention_mask=None,
                output_attentions=False):
        if head_mask is not None:
            # TODO(synk): head_mask multiply on attention probs not implemented in-kernel.
            raise NotImplementedError("head_mask is not supported by this Pallas kernel")

        b, sq, hh = hidden_states.shape
        assert hh == hidden_in
        x2 = hidden_states.reshape(b * sq, hidden_in)

        if encoder_hidden_states is None:
            qkv = _linear(x2, w_qkv, b_qkv, row_block=row_block, col_block=col_block,
                          vmem_limit_bytes=vmem_limit_bytes)
            # Free reshape (no data movement): (B*Sq, 3H) -> (B, Sq, 3, nh, d).
            qkv5 = qkv.reshape(b, sq, 3, num_heads, d)
            q_arr = k_arr = v_arr = qkv5
            t_q, t_k, t_v = 0, 1, 2
            sk = sq
            mask_in = attention_mask
        else:
            # Cross-attention path. TODO(synk): pre-fuse these weight slices if this path is hot.
            be, sk, _ = encoder_hidden_states.shape
            assert be == b
            e2 = encoder_hidden_states.reshape(b * sk, hidden_in)
            q2 = _linear(x2, w_qkv[:, :all_head], b_qkv[:, :all_head],
                         row_block=row_block, col_block=col_block,
                         vmem_limit_bytes=vmem_limit_bytes)
            kv = _linear(e2, w_qkv[:, all_head:], b_qkv[:, all_head:],
                         row_block=row_block, col_block=col_block,
                         vmem_limit_bytes=vmem_limit_bytes)
            q_arr = q2.reshape(b, sq, 1, num_heads, d)
            k_arr = v_arr = kv.reshape(b, sk, 2, num_heads, d)
            t_q, t_k, t_v = 0, 0, 1
            mask_in = encoder_attention_mask

        mask4 = _prep_mask(mask_in, b, num_heads, sq, sk) if mask_in is not None else None

        # TODO(synk): attention_probs dropout is identity (inference/eval mode).
        ctx, probs = _multihead_attention(
            q_arr, k_arr, v_arr, t_q, t_k, t_v, mask4,
            batch=b, num_heads=num_heads, head_dim=d, sq=sq, sk=sk,
            output_attentions=output_attentions, vmem_limit_bytes=vmem_limit_bytes)

        context = ctx.reshape(b, sq, all_head)   # free reshape: heads already interleaved
        if output_attentions:
            return (context, probs)
        return (context,)

    return forward


# --------------------------------------------------------------------------- #
# Self-test                                                                     #
# --------------------------------------------------------------------------- #
if __name__ == "__main__":
    batch, seq, hidden, num_heads = 2, 8, 32, 4
    head_dim = hidden // num_heads

    key = jax.random.PRNGKey(0)
    keys = jax.random.split(key, 8)
    x = jax.random.normal(keys[0], (batch, seq, hidden), dtype=jnp.float32)
    wq = 0.02 * jax.random.normal(keys[1], (hidden, hidden), dtype=jnp.float32)
    wk = 0.02 * jax.random.normal(keys[2], (hidden, hidden), dtype=jnp.float32)
    wv = 0.02 * jax.random.normal(keys[3], (hidden, hidden), dtype=jnp.float32)
    bq = 0.02 * jax.random.normal(keys[4], (hidden,), dtype=jnp.float32)
    bk = 0.02 * jax.random.normal(keys[5], (hidden,), dtype=jnp.float32)
    bv = 0.02 * jax.random.normal(keys[6], (hidden,), dtype=jnp.float32)

    # BERT-style additive mask: (batch, 1, 1, seq); 0 = keep, -10000 = drop.
    keep = (jax.random.uniform(keys[7], (batch, 1, 1, seq)) > 0.25).astype(jnp.float32)
    add_mask = (1.0 - keep) * -10000.0

    attn = make_bert_self_attention(wq, bq, wk, bk, wv, bv, num_heads=num_heads)

    # Pallas forward, no mask.
    (ctx,) = attn(x)
    ctx = jax.block_until_ready(ctx)

    # Pallas forward, masked + attention probs.
    ctx_m, probs_m = attn(x, attention_mask=add_mask, output_attentions=True)
    ctx_m = jax.block_until_ready(ctx_m)

    # Plain-JAX reference (same math as the PyTorch forward).
    def reference(x, mask):
        hp = "highest"
        q = jnp.matmul(x, wq.T, precision=hp) + bq
        k = jnp.matmul(x, wk.T, precision=hp) + bk
        v = jnp.matmul(x, wv.T, precision=hp) + bv

        def split_heads(t):
            return t.reshape(batch, seq, num_heads, head_dim).transpose(0, 2, 1, 3)

        qh, kh, vh = split_heads(q), split_heads(k), split_heads(v)
        s = jnp.einsum("bhqd,bhkd->bhqk", qh, kh, precision=hp) / math.sqrt(head_dim)
        if mask is not None:
            s = s + mask
        p = jax.nn.softmax(s, axis=-1)
        c = jnp.einsum("bhqk,bhkd->bhqd", p, vh, precision=hp)
        c = c.transpose(0, 2, 1, 3).reshape(batch, seq, hidden)
        return c, p

    ref_ctx, _ = reference(x, None)
    ref_ctx_m, ref_probs_m = reference(x, add_mask)

    assert jnp.allclose(ctx, ref_ctx, atol=5e-5, rtol=5e-5), "context mismatch (no mask)"
    assert jnp.allclose(ctx_m, ref_ctx_m, atol=5e-5, rtol=5e-5), "context mismatch (masked)"
    assert jnp.allclose(probs_m, ref_probs_m, atol=5e-5, rtol=5e-5), "attention probs mismatch"

    print("KERNEL_OK")
</pallas_src>

<mosaic_0001>
module attributes {stable_mosaic.version = 11 : i64} {
  func.func @_linear_kernel(%arg0: i32, %arg1: i32, %arg2: memref<16x32xf32, #tpu.memory_space<vmem>>, %arg3: memref<32x96xf32, #tpu.memory_space<vmem>>, %arg4: memref<1x96xf32, #tpu.memory_space<vmem>>, %arg5: memref<16x96xf32, #tpu.memory_space<vmem>>) attributes {dimension_semantics = [#tpu.dimension_semantics<parallel>, #tpu.dimension_semantics<parallel>], iteration_bounds = array<i64: 1, 1>, scalar_prefetch = 0 : i64, scratch_operands = 0 : i64, tpu.core_type = #tpu.core_type<tc>, window_params = [{transform_indices = @transform_0, window_bounds = array<i64: 16, 32>}, {transform_indices = @transform_1, window_bounds = array<i64: 32, 96>}, {transform_indices = @transform_2, window_bounds = array<i64: 1, 96>}, {transform_indices = @transform_3, window_bounds = array<i64: 16, 96>}]} {
    %c0 = arith.constant 0 : index
    %c0_0 = arith.constant 0 : index
    %0 = vector.load %arg2[%c0, %c0_0] : memref<16x32xf32, #tpu.memory_space<vmem>>, vector<16x32xf32>
    %c0_1 = arith.constant 0 : index
    %c0_2 = arith.constant 0 : index
    %1 = vector.load %arg3[%c0_1, %c0_2] : memref<32x96xf32, #tpu.memory_space<vmem>>, vector<32x96xf32>
    %cst = arith.constant dense<0.000000e+00> : vector<16x96xf32>
    %2 = tpu.matmul %0, %1, %cst {dimension_numbers = #tpu.dot_dimension_numbers<[1], [0], [0], [1], [0, 0, 1, 1], [], []>} : vector<16x32xf32>, vector<32x96xf32>, vector<16x96xf32> -> vector<16x96xf32>
    %c0_3 = arith.constant 0 : index
    %c0_4 = arith.constant 0 : index
    %3 = vector.load %arg4[%c0_3, %c0_4] : memref<1x96xf32, #tpu.memory_space<vmem>>, vector<1x96xf32>
    %4 = vector.broadcast %3 : vector<1x96xf32> to vector<16x96xf32>
    %5 = arith.addf %2, %4 : vector<16x96xf32>
    %c0_5 = arith.constant 0 : index
    %c0_6 = arith.constant 0 : index
    %6 = vector.load %arg5[%c0_5, %c0_6] : memref<16x96xf32, #tpu.memory_space<vmem>>, vector<16x96xf32>
    tpu.vector_store %arg5[%c0_5, %c0_6], %5 {strides = array<i32>} : memref<16x96xf32, #tpu.memory_space<vmem>>, vector<16x96xf32>,
    return
  }
  func.func @transform_0(%arg0: i32, %arg1: i32) -> (i32, i32) {
    %c0_i32 = arith.constant 0 : i32
    %c0_i32_0 = arith.constant 0 : i32
    return %arg0, %c0_i32 : i32, i32
  }
  func.func @transform_1(%arg0: i32, %arg1: i32) -> (i32, i32) {
    %c0_i32 = arith.constant 0 : i32
    %c0_i32_0 = arith.constant 0 : i32
    return %c0_i32, %arg1 : i32, i32
  }
  func.func @transform_2(%arg0: i32, %arg1: i32) -> (i32, i32) {
    %c0_i32 = arith.constant 0 : i32
    %c0_i32_0 = arith.constant 0 : i32
    return %c0_i32, %arg1 : i32, i32
  }
  func.func @transform_3(%arg0: i32, %arg1: i32) -> (i32, i32) {
    %c0_i32 = arith.constant 0 : i32
    return %arg0, %arg1 : i32, i32
  }
}

</mosaic_0001>

<llo_original>
// kernel: tpu_custom_call.1
$region0: #{tpu_custom_call.1}
  #allocation0 [shape = 'u32[]', space=smem, size = 0x4, offset = 0x4, fixed_abs, tag = 'smem constant byte address 0x4 - core index']
  #allocation1 [shape = 'u32[144,128]{1,0:T(1,128)}', space=vmem, size = 0x12000, scoped, tag = 'internal scratch']
  %s0 = inlined_call_operand.hbm [shape: f32[16,32], index: 0, kind: input, shape index: {}]
  %s1 = inlined_call_operand.hbm [shape: f32[32,96], index: 1, kind: input, shape index: {}]
  %s2 = inlined_call_operand.vmem [shape: f32[1,96], index: 2, kind: input, shape index: {}]
  %s3 = inlined_call_operand.hbm [shape: f32[16,96], index: 3, kind: output, shape index: {}]
  %s4 = sld [smem:[#allocation0]]
  $region30: #{tpu_custom_call.1} parent=0
    _
  %s6 = ssub.s32 1, %s4
  %s7 = scalar_select 0, %s6, %s4
  $region1: #{tpu_custom_call.1} parent=0
    #allocation2 [shape = 'u8[8192]{0}', space=vmem, size = 0x2000, scoped, tag = 'input window, operand 0, single buffered']
    #allocation3 [shape = 's32[1]{0}', space=sflag, size = 0x4, scoped, tag = 'scoped memory for tpu_custom_call.1']
    #allocation4 [shape = 's32[1]{0}', space=sflag, size = 0x4, scoped, tag = 'scoped memory for tpu_custom_call.1']
    #allocation5 [shape = 'u8[16384]{0}', space=vmem, size = 0x4000, scoped, tag = 'input window, operand 1, single buffered']
    #allocation6 [shape = 's32[1]{0}', space=sflag, size = 0x4, scoped, tag = 'scoped memory for tpu_custom_call.1']
    #allocation7 [shape = 'u8[8192]{0}', space=vmem, size = 0x2000, scoped, tag = 'output window, operand 0, single buffered']
    %8 = vsyncpa [#allocation3], 0
    %9 = vsyncpa [#allocation6], 0
    %10 = vsyncpa [#allocation4], 0
    // Predicated region
    $region2: #{tpu_custom_call.1} parent=1 // pred_check
      _
    $region3: #{tpu_custom_call.1} parent=1 // pred_check_branch
      %12 = sbr.rel (0) target = $region5
    $region4: #{tpu_custom_call.1} parent=1 // pred_region
      %s14 = ssub.s32 256, 256
      %15 = vsyncadd [#allocation3], %s14
      %s16 = sshll.u32 [#allocation2], 4
      %s17 = int_to_ptr.vmem [resolvable:$true] %s16
      %22 = dma.hbm_to_vmem [thread:$0]  %s0, 256, %s17, [#allocation3], 128, 128, 8
    $region5: #{tpu_custom_call.1} parent=1 // pred_fallthru
      _
    // Predicated region
    $region6: #{tpu_custom_call.1} parent=1 // pred_check
      _
    $region7: #{tpu_custom_call.1} parent=1 // pred_check_branch
      %24 = sbr.rel (0) target = $region9
    $region8: #{tpu_custom_call.1} parent=1 // pred_region
      %s26 = ssub.s32 512, 512
      %27 = vsyncadd [#allocation6], %s26
      %s28 = sshll.u32 [#allocation5], 4
      %s29 = int_to_ptr.vmem [resolvable:$true] %s28
      %34 = dma.hbm_to_vmem [thread:$0]  %s1, 512, %s29, [#allocation6], 128, 128, 8
    $region9: #{tpu_custom_call.1} parent=1 // pred_fallthru
      _
    // Predicated region
    $region10: #{tpu_custom_call.1} parent=1 // pred_check
      _
    $region11: #{tpu_custom_call.1} parent=1 // pred_check_branch
      %36 = sbr.rel (0) target = $region13
    $region12: #{tpu_custom_call.1} parent=1 // pred_region
      _
    $region13: #{tpu_custom_call.1} parent=1 // pred_fallthru
      _
    // Predicated region
    $region14: #{tpu_custom_call.1} parent=1 // pred_check
      _
    $region15: #{tpu_custom_call.1} parent=1 // pred_check_branch
      %38 = sbr.rel (0) target = $region17
    $region16: #{tpu_custom_call.1} parent=1 // pred_region
      %39 = dma.done [#allocation3], 256
    $region17: #{tpu_custom_call.1} parent=1 // pred_fallthru
      _
    // Predicated region
    $region18: #{tpu_custom_call.1} parent=1 // pred_check
      _
    $region19: #{tpu_custom_call.1} parent=1 // pred_check_branch
      %41 = sbr.rel (0) target = $region21
    $region20: #{tpu_custom_call.1} parent=1 // pred_region
      %42 = dma.done [#allocation6], 512
    $region21: #{tpu_custom_call.1} parent=1 // pred_fallthru
      _
    %v43 = vld [vmem:[#allocation2] sm:$0xff]
    %v44 = vld [vmem:[#allocation2 + $0x8] sm:$0xff]
    %v45 = vld [vmem:[#allocation5] sm:$0xff]
    %v46 = vld [vmem:[#allocation5 + $0x8] sm:$0xff]
    %v47 = vld [vmem:[#allocation5 + $0x10] sm:$0xff]
    %v48 = vld [vmem:[#allocation5 + $0x18] sm:$0xff]
    %v49 = vld [vmem:[%s2] sm:$0x1]
    %v51 = vlaneseq
    %v52 = vshrl.u32 %v51, 7
    %v53 = vsub.s32 0, %v52
    %v54 = vrot.slane %v49, %v53
    %vm56 = vcmask 261120
    %v58 = vsel %vm56, %v43, 0
    %v61 = vsel %vm56, %v44, 0
    %63 = vmatprep.subr.mxu0 0.0
    %64 = vmatpush1.msra.mxu0 %v45
    %65 = vmatprep.subr.mxu0 0.0
    %66 = vmatpush1.msra.mxu0 %v46
    %67 = vmatprep.subr.mxu0 0.0
    %68 = vmatpush1.msra.mxu0 %v47
    %69 = vmatprep.subr.mxu0 0.0
    %70 = vmatpush1.msra.mxu0 %v48
    %71 = vmatprep.subr.mxu0 0.0
    %72 = vmatpush1.msra.mxu0 0.0
    %73 = vmatprep.subr.mxu0 0.0
    %74 = vmatpush1.msra.mxu0 0.0
    %75 = vmatprep.subr.mxu0 0.0
    %76 = vmatpush1.msra.mxu0 0.0
    %77 = vmatprep.subr.mxu0 0.0
    %78 = vmatpush1.msra.mxu0 0.0
    %79 = vmatprep.subr.mxu0 0.0
    %80 = vmatpush1.msra.mxu0 0.0
    %81 = vmatprep.subr.mxu0 0.0
    %82 = vmatpush1.msra.mxu0 0.0
    %83 = vmatprep.subr.mxu0 0.0
    %84 = vmatpush1.msra.mxu0 0.0
    %85 = vmatprep.subr.mxu0 0.0
    %86 = vmatpush1.msra.mxu0 0.0
    %87 = vmatprep.subr.mxu0 0.0
    %88 = vmatpush1.msra.mxu0 0.0
    %89 = vmatprep.subr.mxu0 0.0
    %90 = vmatpush1.msra.mxu0 0.0
    %91 = vmatprep.subr.mxu0 0.0
    %92 = vmatpush1.msra.mxu0 0.0
    %93 = vmatprep.subr.mxu0 0.0
    %94 = vmatpush1.msra.mxu0 0.0
    %95 = vmatprep.subr.mxu0 0.0
    %96 = vmatpush1.msra.mxu0 0.0
    %97 = vmatprep.subr.mxu0 0.0
    %98 = vmatpush1.msra.mxu0 0.0
    %99 = vmatprep.subr.mxu0 0.0
    %100 = vmatpush1.msra.mxu0 0.0
    %101 = vmatprep.subr.mxu0 0.0
    %102 = vmatpush1.msra.mxu0 0.0
    %103 = vmatprep.subr.mxu0 0.0
    %104 = vmatpush1.msra.mxu0 0.0
    %105 = vmatprep.subr.mxu0 0.0
    %106 = vmatpush1.msra.mxu0 0.0
    %107 = vmatprep.subr.mxu0 0.0
    %108 = vmatpush1.msra.mxu0 0.0
    %109 = vmatprep.subr.mxu0 0.0
    %110 = vmatpush1.msra.mxu0 0.0
    %111 = vmatprep.subr.mxu0 0.0
    %112 = vmatpush1.msra.mxu0 0.0
    %113 = vmatprep.subr.mxu0 0.0
    %114 = vmatpush1.msra.mxu0 0.0
    %115 = vmatprep.subr.mxu0 0.0
    %116 = vmatpush1.msra.mxu0 0.0
    %117 = vmatprep.subr.mxu0 0.0
    %118 = vmatpush1.msra.mxu0 0.0
    %119 = vmatprep.subr.mxu0 0.0
    %120 = vmatpush1.msra.mxu0 0.0
    %121 = vmatprep.subr.mxu0 0.0
    %122 = vmatpush1.msra.mxu0 0.0
    %123 = vmatprep.subr.mxu0 0.0
    %124 = vmatpush1.msra.mxu0 0.0
    %125 = vmatprep.subr.mxu0 0.0
    %126 = vmatpush1.msra.mxu0 0.0
    %127 = vmatprep.mubr.f32.mxu0 0.0
    %128 = vmatmul.mubr.f32.gmra.mrb[0].mxu0 %v58
    %v129 = vpop.f32.mrb[0].mxu0
    %v130 = vadd.f32 %v54, %v129
    %v131 = vpop.f32.mrb[0].mxu0
    %132 = vmatprep.mubr.f32.mxu0 0.0
    %133 = vmatmul.mubr.f32.gmra.mrb[0].mxu0 %v61
    %v134 = vpop.f32.mrb[0].mxu0
    %v135 = vadd.f32 %v54, %v134
    %v136 = vpop.f32.mrb[0].mxu0
    %137 = vdwg.mxu0
    %vm138 = vcmask 785408
    %139 = vst.msk [vmem:[#allocation7] sm:$0xff] %vm138, %v130
    %140 = vst.msk [vmem:[#allocation7 + $0x8] sm:$0xff] %vm138, %v135
    // Predicated region
    $region22: #{tpu_custom_call.1} parent=1 // pred_check
      _
    $region23: #{tpu_custom_call.1} parent=1 // pred_check_branch
      %142 = sbr.rel (0) target = $region25
    $region24: #{tpu_custom_call.1} parent=1 // pred_region
      %s144 = ssub.s32 256, 256
      %145 = vsyncadd [#allocation4], %s144
      %s146 = sshll.u32 [#allocation7], 4
      %s147 = int_to_ptr.vmem [resolvable:$true] %s146
      %152 = dma.vmem_to_hbm [thread:$0]  %s147, 256, %s3, [#allocation4], 128, 128, 8
    $region25: #{tpu_custom_call.1} parent=1 // pred_fallthru
      _
    // Predicated region
    $region26: #{tpu_custom_call.1} parent=1 // pred_check
      _
    $region27: #{tpu_custom_call.1} parent=1 // pred_check_branch
      %154 = sbr.rel (0) target = $region29
    $region28: #{tpu_custom_call.1} parent=1 // pred_region
      %155 = dma.done [#allocation4], 256
    $region29: #{tpu_custom_call.1} parent=1 // pred_fallthru
      _
    %156 = vsyncpa [#allocation3], 1
    %157 = vsyncpa [#allocation6], 1
    %158 = vsyncpa [#allocation4], 1

</llo_original>
